<compile_context>
chip_gen: v7x
topology: tpu7x:2x2x1
jax: 0.10.0
libtpu: 0.0.40
codegen_flags: <defaults>
</compile_context>

<pallas_src>
import math
import numpy as np
import jax
import jax.numpy as jnp
from jax import lax
from jax.experimental import pallas as pl
from jax.experimental.pallas import tpu as pltpu

LEAKY_SLOPE = 0.2
INV_SQRT2 = float(1.0 / np.sqrt(2.0))
_FIR_1D = (np.array([1.0, 3.0, 3.0, 1.0], dtype=np.float64) / 8.0).astype(np.float32)


def _leaky(x):
    return jnp.where(x >= 0, x, LEAKY_SLOPE * x)


def _ru(x, m):
    return (x + m - 1) // m * m


_VMEM_LIMIT = None


def _vmem_limit_bytes():
    """Per-chip VMEM limit (v5e/v6e: ~96 MiB, v7x: ~48 MiB, safe fallback otherwise)."""
    global _VMEM_LIMIT
    if _VMEM_LIMIT is None:
        try:
            cap = int(pltpu.get_tpu_info().vmem_capacity_bytes)
            _VMEM_LIMIT = min(cap * 3 // 4, 100 * 1024 * 1024)
        except Exception:
            _VMEM_LIMIT = 48 * 1024 * 1024
    return _VMEM_LIMIT


def _cparams(grid_rank):
    return pltpu.CompilerParams(
        dimension_semantics=("parallel",) * grid_rank,
        vmem_limit_bytes=_vmem_limit_bytes(),
    )


def _geom(H, W):
    Wp = W + 2                      # padded row width in the flattened layout
    Lp = (H + 3) * Wp               # padded flattened length (covers all tap offsets)
    L = H * Wp                      # flattened output rows (cols >= W are garbage)
    Lr = _ru(L, 8)                  # sublane-aligned per-sample row stride in xcol
    return Wp, Lp, L, Lr


def _pick_bblk(batch, hw, target_rows=256):
    """Batch elements per grid step: fill the MXU on tiny spatial stages, but keep
    >= 2 grid steps so both v7x TensorCores stay busy."""
    want = max(1, target_rows // max(hw, 1))
    best = 1
    for d in range(1, batch + 1):
        if batch % d != 0 or d > want:
            continue
        if batch >= 2 and batch // d < 2:
            continue
        best = d
    return best


# --------------------------- small dense (t-embedding) ---------------------------

def _dense_kernel(post_act):
    def kernel(x_ref, w_ref, b_ref, o_ref):
        acc = jnp.dot(x_ref[...], w_ref[...],
                      preferred_element_type=jnp.float32) + b_ref[...]
        o_ref[...] = _leaky(acc) if post_act else acc
    return kernel


def dense(x, w, b, *, post_act=False):
    M, _ = x.shape
    N = w.shape[1]
    return pl.pallas_call(
        _dense_kernel(post_act),
        out_shape=jax.ShapeDtypeStruct((M, N), jnp.float32),
    )(x, w, b.reshape(1, N))


# ------------------------------ 1x1 start conv ------------------------------

def _start_kernel(x_ref, w_ref, b_ref, o_ref):
    acc = jnp.dot(x_ref[0].astype(jnp.bfloat16), w_ref[...],
                  preferred_element_type=jnp.float32)
    o_ref[0] = (acc + b_ref[...]).astype(jnp.bfloat16)


def start_conv(x, w_bf16, b):
    B, H, W, Cin = x.shape
    Cout = w_bf16.shape[1]
    out = pl.pallas_call(
        _start_kernel,
        grid=(B,),
        in_specs=[
            pl.BlockSpec((1, H * W, Cin), lambda i: (i, 0, 0)),
            pl.BlockSpec((Cin, Cout), lambda i: (0, 0)),
            pl.BlockSpec((1, Cout), lambda i: (0, 0)),
        ],
        out_specs=pl.BlockSpec((1, H * W, Cout), lambda i: (i, 0, 0)),
        out_shape=jax.ShapeDtypeStruct((B, H * W, Cout), jnp.bfloat16),
        compiler_params=_cparams(1),
    )(x.reshape(B, H * W, Cin), w_bf16, b.reshape(1, Cout))
    return out.reshape(B, H, W, Cout)


# --------------------------- fused 3x3 conv kernels ---------------------------
# Padded image is (H+3, W+2) rows/cols flattened to (Lp, C) in a bf16 VMEM scratch.
# The 9 shifted views are stacked along channels into a (Bblk*Lr, 9*Cs) scratch and
# contracted by ONE MXU matmul per grid step.  Flattened row y*(W+2)+x is the conv
# output at (y, x) for x < W; columns x in {W, W+1} are garbage and dropped on store.

def _fill_padded(xs, x_ref, s, H, W, Wp, Cin, pre_act, extra_col=None):
    for y in range(H):
        row = x_ref[s, y, :, :]                       # (W, Cin)
        if pre_act:
            row = _leaky(row)
        base = (y + 1) * Wp + 1
        xs[s, pl.ds(base, W), pl.ds(0, Cin)] = row.astype(jnp.bfloat16)
        if extra_col is not None:                      # stddev feature channel
            xs[s, pl.ds(base, W), pl.ds(Cin, 1)] = extra_col


def _stack_taps(xcol, xs, s, Wp, L, Lr, Cs):
    for t in range(9):
        di, dj = divmod(t, 3)
        xcol[pl.ds(s * Lr, L), pl.ds(t * Cs, Cs)] = xs[s, pl.ds(di * Wp + dj, L), :]


def _conv1_kernel(Bblk, H, W, Cin, Cs, Cout):
    """leaky(conv3x3(leaky(x)) + bias + temb_proj)."""
    Wp, _, L, Lr = _geom(H, W)

    def kernel(x_ref, w_ref, b_ref, temb_ref, o_ref, xs, xcol):
        xs[...] = jnp.zeros(xs.shape, xs.dtype)
        for s in range(Bblk):
            _fill_padded(xs, x_ref, s, H, W, Wp, Cin, pre_act=True)
            _stack_taps(xcol, xs, s, Wp, L, Lr, Cs)
        acc = jnp.dot(xcol[...], w_ref[...], preferred_element_type=jnp.float32)
        for s in range(Bblk):
            add = b_ref[...] + temb_ref[s]             # (1, Cout)
            for y in range(H):
                r0 = s * Lr + y * Wp
                o_ref[s, y] = _leaky(acc[r0:r0 + W, :] + add).astype(jnp.bfloat16)
    return kernel


def conv1_block(h, w_stack, b, temb_proj):
    B, H, W, Cin = h.shape
    Cout = w_stack.shape[1]
    Cs = _ru(Cin, 128)
    assert w_stack.shape[0] == 9 * Cs
    Wp, Lp, L, Lr = _geom(H, W)
    Bblk = _pick_bblk(B, H * W)
    return pl.pallas_call(
        _conv1_kernel(Bblk, H, W, Cin, Cs, Cout),
        grid=(B // Bblk,),
        in_specs=[
            pl.BlockSpec((Bblk, H, W, Cin), lambda i: (i, 0, 0, 0)),
            pl.BlockSpec((9 * Cs, Cout), lambda i: (0, 0)),
            pl.BlockSpec((1, Cout), lambda i: (0, 0)),
            pl.BlockSpec((Bblk, 1, Cout), lambda i: (i, 0, 0)),
        ],
        out_specs=pl.BlockSpec((Bblk, H, W, Cout), lambda i: (i, 0, 0, 0)),
        out_shape=jax.ShapeDtypeStruct((B, H, W, Cout), jnp.bfloat16),
        scratch_shapes=[
            pltpu.VMEM((Bblk, Lp, Cs), jnp.bfloat16),
            pltpu.VMEM((Bblk * Lr, 9 * Cs), jnp.bfloat16),
        ],
        compiler_params=_cparams(1),
    )(h, w_stack, b.reshape(1, Cout), temb_proj.reshape(B, 1, Cout))


def _conv2_kernel(Bblk, H, W, Cmid, Cs, Cskip, Csk, Cout):
    """(conv3x3(out) + bias + skip_in @ skip_w) / sqrt(2); skip is folded into the
    same matmul as a 10th contraction block (center tap of a 1x1 conv)."""
    Wp, _, L, Lr = _geom(H, W)

    def kernel(x_ref, skip_ref, w_ref, b_ref, o_ref, xs, xcol):
        xs[...] = jnp.zeros(xs.shape, xs.dtype)
        if Csk > Cskip:   # zero never-written channel-pad columns of the skip block
            xcol[pl.ds(0, Bblk * Lr), pl.ds(9 * Cs + Cskip, Csk - Cskip)] = (
                jnp.zeros((Bblk * Lr, Csk - Cskip), jnp.bfloat16))
        for s in range(Bblk):
            _fill_padded(xs, x_ref, s, H, W, Wp, Cmid, pre_act=False)
            _stack_taps(xcol, xs, s, Wp, L, Lr, Cs)
            for y in range(H):
                xcol[pl.ds(s * Lr + y * Wp, W), pl.ds(9 * Cs, Cskip)] = (
                    skip_ref[s, y, :, :].astype(jnp.bfloat16))
        acc = jnp.dot(xcol[...], w_ref[...], preferred_element_type=jnp.float32)
        for s in range(Bblk):
            for y in range(H):
                r0 = s * Lr + y * Wp
                o_ref[s, y] = ((acc[r0:r0 + W, :] + b_ref[...]) * INV_SQRT2
                               ).astype(jnp.bfloat16)
    return kernel


def conv2_block(out, skip_in, w_stack, b):
    B, H, W, Cmid = out.shape
    Cskip = skip_in.shape[3]
    Cout = w_stack.shape[1]
    Cs = _ru(Cmid, 128)
    Csk = _ru(Cskip, 128)
    assert w_stack.shape[0] == 9 * Cs + Csk
    Wp, Lp, L, Lr = _geom(H, W)
    Bblk = _pick_bblk(B, H * W)
    return pl.pallas_call(
        _conv2_kernel(Bblk, H, W, Cmid, Cs, Cskip, Csk, Cout),
        grid=(B // Bblk,),
        in_specs=[
            pl.BlockSpec((Bblk, H, W, Cmid), lambda i: (i, 0, 0, 0)),
            pl.BlockSpec((Bblk, H, W, Cskip), lambda i: (i, 0, 0, 0)),
            pl.BlockSpec((9 * Cs + Csk, Cout), lambda i: (0, 0)),
            pl.BlockSpec((1, Cout), lambda i: (0, 0)),
        ],
        out_specs=pl.BlockSpec((Bblk, H, W, Cout), lambda i: (i, 0, 0, 0)),
        out_shape=jax.ShapeDtypeStruct((B, H, W, Cout), jnp.bfloat16),
        scratch_shapes=[
            pltpu.VMEM((Bblk, Lp, Cs), jnp.bfloat16),
            pltpu.VMEM((Bblk * Lr, 9 * Cs + Csk), jnp.bfloat16),
        ],
        compiler_params=_cparams(1),
    )(out, skip_in, w_stack, b.reshape(1, Cout))


def _final_kernel(Bblk, H, W, Cin, Cs, Cout):
    """Fused: concat stddev channel -> leaky(conv3x3 + bias) -> spatial sum -> end linear."""
    Wp, _, L, Lr = _geom(H, W)

    def kernel(x_ref, sd_ref, w_ref, b_ref, we_ref, be_ref, o_ref, xs, xcol):
        xs[...] = jnp.zeros(xs.shape, xs.dtype)
        for s in range(Bblk):
            sd_col = jnp.broadcast_to(sd_ref[s], (W, 1)).astype(jnp.bfloat16)
            _fill_padded(xs, x_ref, s, H, W, Wp, Cin, pre_act=False,
                         extra_col=sd_col)
            _stack_taps(xcol, xs, s, Wp, L, Lr, Cs)
        acc = jnp.dot(xcol[...], w_ref[...], preferred_element_type=jnp.float32)
        colmask = (lax.broadcasted_iota(jnp.int32, (L, 1), 0) % Wp) < W
        for s in range(Bblk):
            act = _leaky(acc[s * Lr:s * Lr + L, :] + b_ref[...])
            act = jnp.where(colmask, act, 0.0)          # drop garbage columns
            ssum = jnp.sum(act, axis=0, keepdims=True)  # (1, Cout) spatial sum
            o_ref[s] = (jnp.sum(ssum * we_ref[...], axis=1, keepdims=True)
                        + be_ref[...])
    return kernel


def final_head(h, sd, w_stack, b, end_w, end_b):
    B, H, W, Cin = h.shape
    Cout = w_stack.shape[1]
    Cs = _ru(Cin + 1, 128)
    assert w_stack.shape[0] == 9 * Cs
    Wp, Lp, L, Lr = _geom(H, W)
    Bblk = _pick_bblk(B, H * W)
    out = pl.pallas_call(
        _final_kernel(Bblk, H, W, Cin, Cs, Cout),
        grid=(B // Bblk,),
        in_specs=[
            pl.BlockSpec((Bblk, H, W, Cin), lambda i: (i, 0, 0, 0)),
            pl.BlockSpec((Bblk, 1, 1), lambda i: (i, 0, 0)),
            pl.BlockSpec((9 * Cs, Cout), lambda i: (0, 0)),
            pl.BlockSpec((1, Cout), lambda i: (0, 0)),
            pl.BlockSpec((1, Cout), lambda i: (0, 0)),
            pl.BlockSpec((1, 1), lambda i: (0, 0)),
        ],
        out_specs=pl.BlockSpec((Bblk, 1, 1), lambda i: (i, 0, 0)),
        out_shape=jax.ShapeDtypeStruct((B, 1, 1), jnp.float32),
        scratch_shapes=[
            pltpu.VMEM((Bblk, Lp, Cs), jnp.bfloat16),
            pltpu.VMEM((Bblk * Lr, 9 * Cs), jnp.bfloat16),
        ],
        compiler_params=_cparams(1),
    )(h, sd.reshape(B, 1, 1), w_stack, b.reshape(1, Cout),
      end_w.reshape(1, Cout), end_b.reshape(1, 1))
    return out.reshape(B, 1)


# ------------------------------ FIR downsample ------------------------------
# up_or_down_sampling.downsample_2d(x, (1,3,3,1), factor=2) on NHWC, pad=(1,1).
# Padding and stride-2 tap selection are done entirely in VMEM.

def _fir_kernel(H, W, C):
    Ho, Wo = H // 2, W // 2

    def kernel(x_ref, o_ref, xp):
        xp[...] = jnp.zeros(xp.shape, xp.dtype)
        xp[pl.ds(1, H), pl.ds(1, W), :] = x_ref[0].astype(jnp.float32)
        acc = jnp.zeros((Ho, Wo, C), jnp.float32)
        for a in range(4):
            for b in range(4):
                wgt = float(_FIR_1D[a] * _FIR_1D[b])
                acc = acc + wgt * xp[pl.ds(a, Ho, 2), pl.ds(b, Wo, 2), :]
        o_ref[0] = acc.astype(jnp.bfloat16)
    return kernel


def fir_downsample_2d(x):
    B, H, W, C = x.shape
    Ho, Wo = H // 2, W // 2
    return pl.pallas_call(
        _fir_kernel(H, W, C),
        grid=(B,),
        in_specs=[pl.BlockSpec((1, H, W, C), lambda i: (i, 0, 0, 0))],
        out_specs=pl.BlockSpec((1, Ho, Wo, C), lambda i: (i, 0, 0, 0)),
        out_shape=jax.ShapeDtypeStruct((B, Ho, Wo, C), jnp.bfloat16),
        scratch_shapes=[pltpu.VMEM((H + 2, W + 2, C), jnp.float32)],
        compiler_params=_cparams(1),
    )(x)


# ------------------------------ minibatch stddev ------------------------------

def _stddev_kernel(x_ref, o_ref):
    x = x_ref[...].astype(jnp.float32)                 # (group, B/group, C*H*W)
    mean = jnp.mean(x, axis=0, keepdims=True)
    var = jnp.mean((x - mean) ** 2, axis=0)            # unbiased=False
    sd = jnp.sqrt(var + 1e-8)
    o_ref[...] = jnp.mean(sd, axis=-1, keepdims=True)  # mean over C,H,W


def minibatch_stddev_feature(h, stddev_group=4):
    """Per-sample stddev scalar (the 513th channel), no HBM concat."""
    B, H, W, C = h.shape
    group = min(B, stddev_group)
    assert B % group == 0, "batch must be divisible by the stddev group"
    bpg = B // group
    sd = pl.pallas_call(
        _stddev_kernel,
        out_shape=jax.ShapeDtypeStruct((bpg, 1), jnp.float32),
    )(h.reshape(group, bpg, H * W * C))
    return jnp.tile(sd.reshape(bpg), (group,))         # (B,) matches torch repeat


# TODO(synk): sinusoidal embedding kept in plain JAX (parameter-free input prep,
# not on the hot path; sin/cos lowering inside Mosaic is not guaranteed).
def sinusoidal_embedding(t, dim=128, max_positions=10000):
    half = dim // 2
    freqs = jnp.exp(jnp.arange(half, dtype=jnp.float32) *
                    (-math.log(max_positions) / (half - 1)))
    args = t.astype(jnp.float32)[:, None] * freqs[None, :]
    return jnp.concatenate([jnp.sin(args), jnp.cos(args)], axis=1)


# --------------------------------- params -----------------------------------

def init_params(key, *, nc=3, ngf=8, ch_mult=(2, 2, 4, 8, 8),
                downsamples=(0, 1, 1, 1), t_emb_dim=128):
    assert len(ch_mult) == len(downsamples) + 1
    keys = iter(jax.random.split(key, 64))

    def w(shape, scale=0.05):
        return scale * jax.random.normal(next(keys), shape, jnp.float32)

    params = {
        "t1_w": w((t_emb_dim, t_emb_dim)), "t1_b": w((t_emb_dim,), 0.01),
        "t2_w": w((t_emb_dim, t_emb_dim)), "t2_b": w((t_emb_dim,), 0.01),
        "start_w": w((nc, ngf * ch_mult[0])), "start_b": w((ngf * ch_mult[0],), 0.01),
        "blocks": [],
    }
    for k in range(len(ch_mult) - 1):
        cin, cout = ngf * ch_mult[k], ngf * ch_mult[k + 1]
        params["blocks"].append({
            "downsample": bool(downsamples[k]),
            "conv1_w": w((9, cin, cout)), "conv1_b": w((cout,), 0.01),
            "dense_w": w((t_emb_dim, cout)), "dense_b": w((cout,), 0.01),
            "conv2_w": w((9, cout, cout)), "conv2_b": w((cout,), 0.01),
            "skip_w": w((cin, cout)),                      # 1x1 conv, bias=False
        })
    cout = ngf * ch_mult[-1]
    params["final_w"] = w((9, cout + 1, cout))
    params["final_b"] = w((cout,), 0.01)
    params["end_w"] = w((cout, 1))
    params["end_b"] = w((1,), 0.01)
    return params


def _stack_conv_w(w9, cs):
    """(9, cin_t, cout) f32 -> (9*cs, cout) bf16 with zero-padded channel rows."""
    k, cin_t, cout = w9.shape
    wpad = jnp.zeros((k, cs, cout), jnp.float32).at[:, :cin_t, :].set(w9)
    return wpad.reshape(k * cs, cout).astype(jnp.bfloat16)


def _pad_rows(w, rows):
    cin, cout = w.shape
    return jnp.zeros((rows, cout), jnp.float32).at[:cin, :].set(w).astype(jnp.bfloat16)


def prepare_params(params):
    """One-time weight preprocessing: bf16 cast + contraction stacking (conv taps,
    fused 1x1 skip rows, stddev channel)."""
    p = dict(params)
    p["start_w_bf16"] = params["start_w"].astype(jnp.bfloat16)
    blocks = []
    for blk in params["blocks"]:
        b = dict(blk)
        cin = blk["conv1_w"].shape[1]
        cmid = blk["conv1_w"].shape[2]
        cs1, cs2, csk = _ru(cin, 128), _ru(cmid, 128), _ru(cin, 128)
        b["conv1_w_stack"] = _stack_conv_w(blk["conv1_w"], cs1)
        b["conv2_w_stack"] = jnp.concatenate(
            [_stack_conv_w(blk["conv2_w"], cs2), _pad_rows(blk["skip_w"], csk)],
            axis=0)
        blocks.append(b)
    p["blocks"] = blocks
    cin_f = params["final_w"].shape[1]                   # cout_last + 1 (stddev chan)
    p["final_w_stack"] = _stack_conv_w(params["final_w"], _ru(cin_f, 128))
    return p


# --------------------------------- model -----------------------------------

def marginal_discriminator_forward(params, x_nchw, t, x_t=None, stddev_group=4):
    """x_nchw: (B, nc, H, W) float32, t: (B,). x_t matches the PyTorch signature
    but is unused by the reference forward."""
    del x_t

    # TimestepEmbedding: sinusoidal -> dense -> leaky -> dense, then outer act().
    temb = sinusoidal_embedding(t, params["t1_w"].shape[0])
    temb = dense(temb, params["t1_w"], params["t1_b"], post_act=True)
    t_embed = dense(temb, params["t2_w"], params["t2_b"], post_act=True)

    # start conv (1x1)
    h = jnp.transpose(x_nchw, (0, 2, 3, 1)).astype(jnp.float32)   # NCHW -> NHWC
    h = start_conv(h, params["start_w_bf16"], params["start_b"])

    # DownConvBlocks
    for blk in params["blocks"]:
        temb_proj = dense(t_embed, blk["dense_w"], blk["dense_b"])
        out = conv1_block(h, blk["conv1_w_stack"], blk["conv1_b"], temb_proj)
        skip_in = h
        if blk["downsample"]:
            out = fir_downsample_2d(out)
            skip_in = fir_downsample_2d(skip_in)
        h = conv2_block(out, skip_in, blk["conv2_w_stack"], blk["conv2_b"])

    # minibatch stddev scalar, then fused final conv + act + spatial sum + end linear
    sd = minibatch_stddev_feature(h, stddev_group)
    return final_head(h, sd, params["final_w_stack"], params["final_b"],
                      params["end_w"], params["end_b"])


if __name__ == "__main__":
    key = jax.random.PRNGKey(0)
    kx, kt, kxt, kp = jax.random.split(key, 4)

    B, nc, H, W = 4, 3, 16, 16
    ngf = 8                                            # small test width (default is 64)
    x = jax.random.normal(kx, (B, nc, H, W), jnp.float32)
    t = jax.random.uniform(kt, (B,), jnp.float32)
    x_t = jax.random.normal(kxt, (B, nc, H, W), jnp.float32)   # unused by forward

    params = prepare_params(init_params(kp, nc=nc, ngf=ngf))
    out = marginal_discriminator_forward(params, x, t, x_t)
    out = jax.block_until_ready(out)

    assert out.shape == (B, 1), out.shape
    assert bool(jnp.all(jnp.isfinite(out)))
    print("KERNEL_OK")
</pallas_src>

<mosaic_0001>
module attributes {stable_mosaic.version = 11 : i64} {
  func.func @kernel(%arg0: memref<4x128xf32, #tpu.memory_space<vmem>>, %arg1: memref<128x128xf32, #tpu.memory_space<vmem>>, %arg2: memref<1x128xf32, #tpu.memory_space<vmem>>, %arg3: memref<4x128xf32, #tpu.memory_space<vmem>>) attributes {dimension_semantics = [], scalar_prefetch = 0 : i64, scratch_operands = 0 : i64, tpu.core_type = #tpu.core_type<tc>} {
    %c0 = arith.constant 0 : index
    %c0_0 = arith.constant 0 : index
    %0 = vector.load %arg0[%c0, %c0_0] : memref<4x128xf32, #tpu.memory_space<vmem>>, vector<4x128xf32>
    %c0_1 = arith.constant 0 : index
    %c0_2 = arith.constant 0 : index
    %1 = vector.load %arg1[%c0_1, %c0_2] : memref<128x128xf32, #tpu.memory_space<vmem>>, vector<128x128xf32>
    %cst = arith.constant dense<0.000000e+00> : vector<4x128xf32>
    %2 = tpu.matmul %0, %1, %cst {dimension_numbers = #tpu.dot_dimension_numbers<[1], [0], [0], [1], [0, 0, 1, 1], [], []>} : vector<4x128xf32>, vector<128x128xf32>, vector<4x128xf32> -> vector<4x128xf32>
    %c0_3 = arith.constant 0 : index
    %c0_4 = arith.constant 0 : index
    %3 = vector.load %arg2[%c0_3, %c0_4] : memref<1x128xf32, #tpu.memory_space<vmem>>, vector<1x128xf32>
    %4 = vector.broadcast %3 : vector<1x128xf32> to vector<4x128xf32>
    %5 = arith.addf %2, %4 : vector<4x128xf32>
    %cst_5 = arith.constant 0.000000e+00 : f32
    %6 = vector.broadcast %cst_5 : f32 to vector<4x128xf32>
    %7 = arith.cmpf oge, %5, %6 : vector<4x128xf32>
    %cst_6 = arith.constant 2.000000e-01 : f32
    %8 = vector.broadcast %cst_6 : f32 to vector<4x128xf32>
    %9 = arith.mulf %8, %5 : vector<4x128xf32>
    %10 = arith.select %7, %5, %9 : vector<4x128xi1>, vector<4x128xf32>
    %c0_7 = arith.constant 0 : index
    %c0_8 = arith.constant 0 : index
    %11 = vector.load %arg3[%c0_7, %c0_8] : memref<4x128xf32, #tpu.memory_space<vmem>>, vector<4x128xf32>
    tpu.vector_store %arg3[%c0_7, %c0_8], %10 {strides = array<i32>} : memref<4x128xf32, #tpu.memory_space<vmem>>, vector<4x128xf32>,
    return
  }
}

</mosaic_0001>

<llo_original>
// kernel: tpu_custom_call.1
$region0: #{tpu_custom_call.1}
  #allocation0 [shape = 'u32[]', space=smem, size = 0x4, offset = 0x4, fixed_abs, tag = 'smem constant byte address 0x4 - core index']
  #allocation1 [shape = 'u32[144,128]{1,0:T(1,128)}', space=vmem, size = 0x12000, scoped, tag = 'internal scratch']
  %s0 = inlined_call_operand.hbm [shape: f32[4,128], index: 0, kind: input, shape index: {}]
  %s1 = inlined_call_operand.hbm [shape: f32[128,128], index: 1, kind: input, shape index: {}]
  %s2 = inlined_call_operand.vmem [shape: f32[1,128], index: 2, kind: input, shape index: {}]
  %s3 = inlined_call_operand.hbm [shape: f32[4,128], index: 3, kind: output, shape index: {}]
  %s4 = sld [smem:[#allocation0]]
  $region30: #{tpu_custom_call.1} parent=0
    _
  %s6 = ssub.s32 1, %s4
  %s7 = scalar_select 0, %s6, %s4
  $region1: #{tpu_custom_call.1} parent=0
    #allocation2 [shape = 'u8[2048]{0}', space=vmem, size = 0x800, scoped, tag = 'input window, operand 0, single buffered']
    #allocation3 [shape = 's32[1]{0}', space=sflag, size = 0x4, scoped, tag = 'scoped memory for tpu_custom_call.1']
    #allocation4 [shape = 's32[1]{0}', space=sflag, size = 0x4, scoped, tag = 'scoped memory for tpu_custom_call.1']
    #allocation5 [shape = 'u8[65536]{0}', space=vmem, size = 0x10000, scoped, tag = 'input window, operand 1, single buffered']
    #allocation6 [shape = 's32[1]{0}', space=sflag, size = 0x4, scoped, tag = 'scoped memory for tpu_custom_call.1']
    #allocation7 [shape = 'u8[2048]{0}', space=vmem, size = 0x800, scoped, tag = 'output window, operand 0, single buffered']
    %8 = vsyncpa [#allocation3], 0
    %9 = vsyncpa [#allocation6], 0
    %10 = vsyncpa [#allocation4], 0
    // Predicated region
    $region2: #{tpu_custom_call.1} parent=1 // pred_check
      _
    $region3: #{tpu_custom_call.1} parent=1 // pred_check_branch
      %12 = sbr.rel (0) target = $region5
    $region4: #{tpu_custom_call.1} parent=1 // pred_region
      %s14 = ssub.s32 64, 64
      %15 = vsyncadd [#allocation3], %s14
      %s17 = sshll.u32 [#allocation2], 4
      %s18 = int_to_ptr.vmem [resolvable:$true] %s17
      %20 = dma.hbm_to_vmem [thread:$0]  %s0, 64, %s18, [#allocation3]
    $region5: #{tpu_custom_call.1} parent=1 // pred_fallthru
      _
    // Predicated region
    $region6: #{tpu_custom_call.1} parent=1 // pred_check
      _
    $region7: #{tpu_custom_call.1} parent=1 // pred_check_branch
      %22 = sbr.rel (0) target = $region9
    $region8: #{tpu_custom_call.1} parent=1 // pred_region
      %s24 = ssub.s32 2048, 2048
      %25 = vsyncadd [#allocation6], %s24
      %s26 = sshll.u32 [#allocation5], 4
      %s27 = int_to_ptr.vmem [resolvable:$true] %s26
      %32 = dma.hbm_to_vmem [thread:$0]  %s1, 2048, %s27, [#allocation6], 128, 128, 8
    $region9: #{tpu_custom_call.1} parent=1 // pred_fallthru
      _
    // Predicated region
    $region10: #{tpu_custom_call.1} parent=1 // pred_check
      _
    $region11: #{tpu_custom_call.1} parent=1 // pred_check_branch
      %34 = sbr.rel (0) target = $region13
    $region12: #{tpu_custom_call.1} parent=1 // pred_region
      _
    $region13: #{tpu_custom_call.1} parent=1 // pred_fallthru
      _
    // Predicated region
    $region14: #{tpu_custom_call.1} parent=1 // pred_check
      _
    $region15: #{tpu_custom_call.1} parent=1 // pred_check_branch
      %36 = sbr.rel (0) target = $region17
    $region16: #{tpu_custom_call.1} parent=1 // pred_region
      %37 = dma.done [#allocation3], 64
    $region17: #{tpu_custom_call.1} parent=1 // pred_fallthru
      _
    // Predicated region
    $region18: #{tpu_custom_call.1} parent=1 // pred_check
      _
    $region19: #{tpu_custom_call.1} parent=1 // pred_check_branch
      %39 = sbr.rel (0) target = $region21
    $region20: #{tpu_custom_call.1} parent=1 // pred_region
      %40 = dma.done [#allocation6], 2048
    $region21: #{tpu_custom_call.1} parent=1 // pred_fallthru
      _
    %v41 = vld [vmem:[#allocation2] sm:$0xf]
    %v42 = vld [vmem:[#allocation5] sm:$0xff]
    %v43 = vld [vmem:[#allocation5 + $0x8] sm:$0xff]
    %v44 = vld [vmem:[#allocation5 + $0x10] sm:$0xff]
    %v45 = vld [vmem:[#allocation5 + $0x18] sm:$0xff]
    %v46 = vld [vmem:[#allocation5 + $0x20] sm:$0xff]
    %v47 = vld [vmem:[#allocation5 + $0x28] sm:$0xff]
    %v48 = vld [vmem:[#allocation5 + $0x30] sm:$0xff]
    %v49 = vld [vmem:[#allocation5 + $0x38] sm:$0xff]
    %v50 = vld [vmem:[#allocation5 + $0x40] sm:$0xff]
    %v51 = vld [vmem:[#allocation5 + $0x48] sm:$0xff]
    %v52 = vld [vmem:[#allocation5 + $0x50] sm:$0xff]
    %v53 = vld [vmem:[#allocation5 + $0x58] sm:$0xff]
    %v54 = vld [vmem:[#allocation5 + $0x60] sm:$0xff]
    %v55 = vld [vmem:[#allocation5 + $0x68] sm:$0xff]
    %v56 = vld [vmem:[#allocation5 + $0x70] sm:$0xff]
    %v57 = vld [vmem:[#allocation5 + $0x78] sm:$0xff]
    %v58 = vld [vmem:[%s2] sm:$0x1]
    %v60 = vlaneseq
    %v61 = vshrl.u32 %v60, 7
    %v62 = vsub.s32 0, %v61
    %v63 = vrot.slane %v58, %v62
    %65 = vmatprep.subr.mxu0 0.0
    %66 = vmatpush1.msra.mxu0 %v42
    %67 = vmatprep.subr.mxu0 0.0
    %68 = vmatpush1.msra.mxu0 %v43
    %69 = vmatprep.subr.mxu0 0.0
    %70 = vmatpush1.msra.mxu0 %v44
    %71 = vmatprep.subr.mxu0 0.0
    %72 = vmatpush1.msra.mxu0 %v45
    %73 = vmatprep.subr.mxu0 0.0
    %74 = vmatpush1.msra.mxu0 %v46
    %75 = vmatprep.subr.mxu0 0.0
    %76 = vmatpush1.msra.mxu0 %v47
    %77 = vmatprep.subr.mxu0 0.0
    %78 = vmatpush1.msra.mxu0 %v48
    %79 = vmatprep.subr.mxu0 0.0
    %80 = vmatpush1.msra.mxu0 %v49
    %81 = vmatprep.subr.mxu0 0.0
    %82 = vmatpush1.msra.mxu0 %v50
    %83 = vmatprep.subr.mxu0 0.0
    %84 = vmatpush1.msra.mxu0 %v51
    %85 = vmatprep.subr.mxu0 0.0
    %86 = vmatpush1.msra.mxu0 %v52
    %87 = vmatprep.subr.mxu0 0.0
    %88 = vmatpush1.msra.mxu0 %v53
    %89 = vmatprep.subr.mxu0 0.0
    %90 = vmatpush1.msra.mxu0 %v54
    %91 = vmatprep.subr.mxu0 0.0
    %92 = vmatpush1.msra.mxu0 %v55
    %93 = vmatprep.subr.mxu0 0.0
    %94 = vmatpush1.msra.mxu0 %v56
    %95 = vmatprep.subr.mxu0 0.0
    %96 = vmatpush1.msra.mxu0 %v57
    %97 = vmatprep.subr.mxu0 0.0
    %98 = vmatpush1.msra.mxu0 0.0
    %99 = vmatprep.subr.mxu0 0.0
    %100 = vmatpush1.msra.mxu0 0.0
    %101 = vmatprep.subr.mxu0 0.0
    %102 = vmatpush1.msra.mxu0 0.0
    %103 = vmatprep.subr.mxu0 0.0
    %104 = vmatpush1.msra.mxu0 0.0
    %105 = vmatprep.subr.mxu0 0.0
    %106 = vmatpush1.msra.mxu0 0.0
    %107 = vmatprep.subr.mxu0 0.0
    %108 = vmatpush1.msra.mxu0 0.0
    %109 = vmatprep.subr.mxu0 0.0
    %110 = vmatpush1.msra.mxu0 0.0
    %111 = vmatprep.subr.mxu0 0.0
    %112 = vmatpush1.msra.mxu0 0.0
    %113 = vmatprep.subr.mxu0 0.0
    %114 = vmatpush1.msra.mxu0 0.0
    %115 = vmatprep.subr.mxu0 0.0
    %116 = vmatpush1.msra.mxu0 0.0
    %117 = vmatprep.subr.mxu0 0.0
    %118 = vmatpush1.msra.mxu0 0.0
    %119 = vmatprep.subr.mxu0 0.0
    %120 = vmatpush1.msra.mxu0 0.0
    %121 = vmatprep.subr.mxu0 0.0
    %122 = vmatpush1.msra.mxu0 0.0
    %123 = vmatprep.subr.mxu0 0.0
    %124 = vmatpush1.msra.mxu0 0.0
    %125 = vmatprep.subr.mxu0 0.0
    %126 = vmatpush1.msra.mxu0 0.0
    %127 = vmatprep.subr.mxu0 0.0
    %128 = vmatpush1.msra.mxu0 0.0
    %129 = vmatprep.mubr.f32.mxu0 0.0
    %130 = vmatmul.mubr.f32.gmra.mrb[0].mxu0 %v41
    %v131 = vpop.f32.mrb[0].mxu0
    %v132 = vadd.f32 %v63, %v131
    %v133 = vpop.f32.mrb[0].mxu0
    %134 = vdwg.mxu0
    %vm135 = vcmp.ge.f32.partialorder %v132, 0.0
    %v136 = vmul.f32 %v132, 0.2
    %v137 = vsel %vm135, %v132, %v136
    %138 = vst [vmem:[#allocation7] sm:$0xf] %v137
    // Predicated region
    $region22: #{tpu_custom_call.1} parent=1 // pred_check
      _
    $region23: #{tpu_custom_call.1} parent=1 // pred_check_branch
      %140 = sbr.rel (0) target = $region25
    $region24: #{tpu_custom_call.1} parent=1 // pred_region
      %s142 = ssub.s32 64, 64
      %143 = vsyncadd [#allocation4], %s142
      %s145 = sshll.u32 [#allocation7], 4
      %s146 = int_to_ptr.vmem [resolvable:$true] %s145
      %148 = dma.vmem_to_hbm [thread:$0]  %s146, 64, %s3, [#allocation4]
    $region25: #{tpu_custom_call.1} parent=1 // pred_fallthru
      _
    // Predicated region
    $region26: #{tpu_custom_call.1} parent=1 // pred_check
      _
    $region27: #{tpu_custom_call.1} parent=1 // pred_check_branch
      %150 = sbr.rel (0) target = $region29
    $region28: #{tpu_custom_call.1} parent=1 // pred_region
      %151 = dma.done [#allocation4], 64
    $region29: #{tpu_custom_call.1} parent=1 // pred_fallthru
      _
    %152 = vsyncpa [#allocation3], 1
    %153 = vsyncpa [#allocation6], 1
    %154 = vsyncpa [#allocation4], 1

</llo_original>
